<compile_context>
chip_gen: v7x
topology: tpu7x:2x2x1
jax: 0.10.0
libtpu: 0.0.40
codegen_flags: <defaults>
</compile_context>

<pallas_src>
import math

import jax
import jax.numpy as jnp
import numpy as np
from jax.experimental import pallas as pl
from jax.experimental.pallas import tpu as pltpu


# ----------------------------------------------------------------------------
# Pallas kernel: fused SFT layer, channels on sublanes, spatial on lanes.
#   fea_ref : (64, TS)  input dtype   features for TS pixels
#   cond_ref: (32, TS)  input dtype   condition maps for the same pixels
#   w0_ref  : (64, 32)  bf16          [scale_conv0 ; shift_conv0] stacked on rows
#   b0_ref  : (64, 1)   f32
#   ws1_ref : (64, 32)  bf16          scale_conv1
#   wh1_ref : (64, 32)  bf16          shift_conv1
#   bs1_ref : (64, 1)   f32
#   bh1_ref : (64, 1)   f32
#   o_ref   : (64, TS)  input dtype
# ----------------------------------------------------------------------------
def _sft_kernel(fea_ref, cond_ref, w0_ref, b0_ref, ws1_ref, wh1_ref,
                bs1_ref, bh1_ref, o_ref):
    cond = cond_ref[...].astype(jnp.bfloat16)                       # (32, TS)
    # stage 0: both branches' first 1x1 conv in one dot -> u = [u_scale; u_shift]
    u = jnp.dot(w0_ref[...], cond,
                preferred_element_type=jnp.float32) + b0_ref[...]   # (64, TS) f32
    u = jnp.where(u >= 0.0, u, 0.01 * u)                            # leaky_relu(0.01)
    u = u.astype(jnp.bfloat16)
    # stage 1: two dense (64,32)x(32,TS) dots (no block-diagonal zero work)
    scale = jnp.dot(ws1_ref[...], u[:32, :],
                    preferred_element_type=jnp.float32) + bs1_ref[...]
    shift = jnp.dot(wh1_ref[...], u[32:, :],
                    preferred_element_type=jnp.float32) + bh1_ref[...]
    fea = fea_ref[...].astype(jnp.float32)                          # epilogue in f32
    o_ref[...] = (fea * scale + shift).astype(o_ref.dtype)


def _choose_spatial_tile(s, n):
    """Spatial (lane) tile TS.

    - TS is a multiple of 128 lanes, or the full spatial extent (always legal).
    - Prefer large tiles (bigger DMA bursts, fewer per-step overheads), capped
      at 4096 lanes (~2.5 MiB of f32 blocks per step -> fits 32 MiB scoped VMEM
      double-buffered on all generations, including 64 MiB-VMEM v7x).
    - Keep >= 4 total grid steps when the map allows it, so v7x (2 TensorCores)
      gets >= 2 steps per core and input/output DMAs actually overlap.
    """
    if s % 128 != 0 or s <= 128:
        if s <= 4096:
            return s                      # one full-width block
        # large non-multiple-of-128 maps fall through; ragged tail is masked
    max_ts = min(4096, max(128, (s // 128) * 128))
    want_tiles = max(1, -(-4 // max(n, 1)))              # ceil(4 / n)
    split_ts = max(128, (s // want_tiles) // 128 * 128)
    return min(max_ts, split_ts)


# ----------------------------------------------------------------------------
# Parameter handling
# ----------------------------------------------------------------------------
def init_sft_params(key):
    """Parameters in the PyTorch Conv2d layout: w (Cout, Cin, 1, 1), b (Cout,)."""
    def conv1x1(k, cin, cout):
        kw, kb = jax.random.split(k)
        bound = 1.0 / math.sqrt(cin)
        w = jax.random.uniform(kw, (cout, cin, 1, 1), jnp.float32, -bound, bound)
        b = jax.random.uniform(kb, (cout,), jnp.float32, -bound, bound)
        return w, b

    k0, k1, k2, k3 = jax.random.split(key, 4)
    p = {}
    p["scale_conv0_w"], p["scale_conv0_b"] = conv1x1(k0, 32, 32)
    p["scale_conv1_w"], p["scale_conv1_b"] = conv1x1(k1, 32, 64)
    p["shift_conv0_w"], p["shift_conv0_b"] = conv1x1(k2, 32, 32)
    p["shift_conv1_w"], p["shift_conv1_b"] = conv1x1(k3, 32, 64)
    return p


def pack_sft_params(p):
    """Pack torch-layout 1x1-conv weights into the NCHW-native kernel form."""
    def mat(w):  # (Cout, Cin, 1, 1) -> (Cout, Cin): out-channels on sublanes
        return w[:, :, 0, 0]

    ws0, wh0 = mat(p["scale_conv0_w"]), mat(p["shift_conv0_w"])    # (32, 32)
    ws1, wh1 = mat(p["scale_conv1_w"]), mat(p["shift_conv1_w"])    # (64, 32)

    w0 = jnp.concatenate([ws0, wh0], axis=0)                       # (64, 32)
    b0 = jnp.concatenate([p["scale_conv0_b"],
                          p["shift_conv0_b"]], axis=0)[:, None]    # (64, 1)

    return {
        "w0": w0.astype(jnp.bfloat16),
        "b0": b0.astype(jnp.float32),
        "ws1": ws1.astype(jnp.bfloat16),
        "wh1": wh1.astype(jnp.bfloat16),
        "bs1": p["scale_conv1_b"][:, None].astype(jnp.float32),
        "bh1": p["shift_conv1_b"][:, None].astype(jnp.float32),
    }


# ----------------------------------------------------------------------------
# Wrapper (PyTorch-style NCHW boundary, like SFTLayer_torch.forward(x))
#   fea_nchw  = x[0] : (N, 64, H, W)
#   cond_nchw = x[1] : (N, 32, H, W)
# ----------------------------------------------------------------------------
def sft_layer(packed, fea_nchw, cond_nchw):
    n, cf, h, w = fea_nchw.shape
    assert cf == 64 and cond_nchw.shape == (n, 32, h, w)
    s = h * w

    fea = fea_nchw.reshape(n, 64, s)      # free reshapes (contiguous last dims)
    cond = cond_nchw.reshape(n, 32, s)

    ts = _choose_spatial_tile(s, n)
    grid = (n, pl.cdiv(s, ts))            # ragged last block handled by masking

    out = pl.pallas_call(
        _sft_kernel,
        grid=grid,
        in_specs=[
            pl.BlockSpec((None, 64, ts), lambda b, i: (b, 0, i)),   # fea
            pl.BlockSpec((None, 32, ts), lambda b, i: (b, 0, i)),   # cond
            pl.BlockSpec((64, 32), lambda b, i: (0, 0)),            # w0 (bf16)
            pl.BlockSpec((64, 1), lambda b, i: (0, 0)),             # b0 (f32)
            pl.BlockSpec((64, 32), lambda b, i: (0, 0)),            # ws1 (bf16)
            pl.BlockSpec((64, 32), lambda b, i: (0, 0)),            # wh1 (bf16)
            pl.BlockSpec((64, 1), lambda b, i: (0, 0)),             # bs1 (f32)
            pl.BlockSpec((64, 1), lambda b, i: (0, 0)),             # bh1 (f32)
        ],
        out_specs=pl.BlockSpec((None, 64, ts), lambda b, i: (b, 0, i)),
        out_shape=jax.ShapeDtypeStruct((n, 64, s), fea_nchw.dtype),
        compiler_params=pltpu.CompilerParams(
            dimension_semantics=("parallel", "parallel"),
            vmem_limit_bytes=32 * 1024 * 1024,
        ),
    )(fea, cond, packed["w0"], packed["b0"], packed["ws1"], packed["wh1"],
      packed["bs1"], packed["bh1"])

    return out.reshape(n, 64, h, w)


# ----------------------------------------------------------------------------
# Pure-JAX reference (mirrors SFTLayer_torch.forward, with the same bf16-input /
# f32-accumulate matmul precision as the kernel) -- used only for verification.
# ----------------------------------------------------------------------------
def sft_layer_ref(p, fea_nchw, cond_nchw):
    def mat(w):
        return w[:, :, 0, 0]                       # (Cout, Cin)

    def rnd(x):                                    # emulate bf16 MXU operand rounding
        return x.astype(jnp.bfloat16).astype(jnp.float32)

    n, _, h, w = fea_nchw.shape
    s = h * w
    fea = fea_nchw.reshape(n, 64, s).astype(jnp.float32)
    cond = cond_nchw.reshape(n, 32, s).astype(jnp.float32)

    def branch(w0, b0, w1, b1):
        t = jnp.einsum("oc,ncs->nos", rnd(mat(w0)), rnd(cond)) + b0[None, :, None]
        t = jnp.where(t >= 0, t, 0.01 * t)
        return jnp.einsum("oc,ncs->nos", rnd(mat(w1)), rnd(t)) + b1[None, :, None]

    scale = branch(p["scale_conv0_w"], p["scale_conv0_b"],
                   p["scale_conv1_w"], p["scale_conv1_b"])
    shift = branch(p["shift_conv0_w"], p["shift_conv0_b"],
                   p["shift_conv1_w"], p["shift_conv1_b"])
    out = fea * scale + shift
    return out.reshape(n, 64, h, w).astype(fea_nchw.dtype)


if __name__ == "__main__":
    key = jax.random.PRNGKey(0)
    kp, kf, kc = jax.random.split(key, 3)

    params = init_sft_params(kp)
    packed = pack_sft_params(params)

    # x[0]: features (N, 64, H, W); x[1]: SFT condition maps (N, 32, H, W)
    fea = jax.random.normal(kf, (2, 64, 16, 16), jnp.float32)
    cond = jax.random.normal(kc, (2, 32, 16, 16), jnp.float32)

    fwd = jax.jit(sft_layer)
    out = jax.block_until_ready(fwd(packed, fea, cond))

    assert out.shape == (2, 64, 16, 16), out.shape
    assert out.dtype == fea.dtype

    ref = jax.block_until_ready(sft_layer_ref(params, fea, cond))
    np.testing.assert_allclose(np.asarray(out), np.asarray(ref),
                               rtol=1e-2, atol=1e-2)

    print("KERNEL_OK")
</pallas_src>

<mosaic_0001>
module attributes {stable_mosaic.version = 11 : i64} {
  func.func @_sft_kernel(%arg0: i32, %arg1: i32, %arg2: memref<1x64x128xf32, #tpu.memory_space<vmem>>, %arg3: memref<1x32x128xf32, #tpu.memory_space<vmem>>, %arg4: memref<64x32xbf16, #tpu.memory_space<vmem>>, %arg5: memref<64x1xf32, #tpu.memory_space<vmem>>, %arg6: memref<64x32xbf16, #tpu.memory_space<vmem>>, %arg7: memref<64x32xbf16, #tpu.memory_space<vmem>>, %arg8: memref<64x1xf32, #tpu.memory_space<vmem>>, %arg9: memref<64x1xf32, #tpu.memory_space<vmem>>, %arg10: memref<1x64x128xf32, #tpu.memory_space<vmem>>) attributes {dimension_semantics = [#tpu.dimension_semantics<parallel>, #tpu.dimension_semantics<parallel>], iteration_bounds = array<i64: 2, 2>, scalar_prefetch = 0 : i64, scratch_operands = 0 : i64, tpu.core_type = #tpu.core_type<tc>, window_params = [{transform_indices = @transform_0, window_bounds = array<i64: 1, 64, 128>}, {transform_indices = @transform_1, window_bounds = array<i64: 1, 32, 128>}, {pipeline_mode = #tpu.pipeline_mode<synchronous>, transform_indices = @transform_2, window_bounds = array<i64: 64, 32>}, {pipeline_mode = #tpu.pipeline_mode<synchronous>, transform_indices = @transform_3, window_bounds = array<i64: 64, 1>}, {pipeline_mode = #tpu.pipeline_mode<synchronous>, transform_indices = @transform_4, window_bounds = array<i64: 64, 32>}, {pipeline_mode = #tpu.pipeline_mode<synchronous>, transform_indices = @transform_5, window_bounds = array<i64: 64, 32>}, {pipeline_mode = #tpu.pipeline_mode<synchronous>, transform_indices = @transform_6, window_bounds = array<i64: 64, 1>}, {pipeline_mode = #tpu.pipeline_mode<synchronous>, transform_indices = @transform_7, window_bounds = array<i64: 64, 1>}, {transform_indices = @transform_8, window_bounds = array<i64: 1, 64, 128>}]} {
    %c0 = arith.constant 0 : index
    %c0_0 = arith.constant 0 : index
    %c0_1 = arith.constant 0 : index
    %0 = vector.load %arg3[%c0, %c0_0, %c0_1] : memref<1x32x128xf32, #tpu.memory_space<vmem>>, vector<1x32x128xf32>
    %1 = vector.shape_cast %0 : vector<1x32x128xf32> to vector<32x128xf32>
    %2 = arith.truncf %1 : vector<32x128xf32> to vector<32x128xbf16>
    %c0_2 = arith.constant 0 : index
    %c0_3 = arith.constant 0 : index
    %3 = vector.load %arg4[%c0_2, %c0_3] : memref<64x32xbf16, #tpu.memory_space<vmem>>, vector<64x32xbf16>
    %cst = arith.constant dense<0.000000e+00> : vector<64x128xf32>
    %4 = tpu.matmul %3, %2, %cst {dimension_numbers = #tpu.dot_dimension_numbers<[1], [0], [0], [1], [0, 0, 1, 1], [], []>} : vector<64x32xbf16>, vector<32x128xbf16>, vector<64x128xf32> -> vector<64x128xf32>
    %c0_4 = arith.constant 0 : index
    %c0_5 = arith.constant 0 : index
    %5 = vector.load %arg5[%c0_4, %c0_5] : memref<64x1xf32, #tpu.memory_space<vmem>>, vector<64x1xf32>
    %6 = vector.broadcast %5 : vector<64x1xf32> to vector<64x128xf32>
    %7 = arith.addf %4, %6 : vector<64x128xf32>
    %cst_6 = arith.constant 0.000000e+00 : f32
    %8 = vector.broadcast %cst_6 : f32 to vector<64x128xf32>
    %9 = arith.cmpf oge, %7, %8 : vector<64x128xf32>
    %cst_7 = arith.constant 0.00999999977 : f32
    %10 = vector.broadcast %cst_7 : f32 to vector<64x128xf32>
    %11 = arith.mulf %10, %7 : vector<64x128xf32>
    %12 = arith.select %9, %7, %11 : vector<64x128xi1>, vector<64x128xf32>
    %13 = arith.truncf %12 : vector<64x128xf32> to vector<64x128xbf16>
    %c0_8 = arith.constant 0 : index
    %c0_9 = arith.constant 0 : index
    %14 = vector.load %arg6[%c0_8, %c0_9] : memref<64x32xbf16, #tpu.memory_space<vmem>>, vector<64x32xbf16>
    %15 = vector.extract_strided_slice %13 {offsets = [0, 0], sizes = [32, 128], strides = [1, 1]} : vector<64x128xbf16> to vector<32x128xbf16>
    %cst_10 = arith.constant dense<0.000000e+00> : vector<64x128xf32>
    %16 = tpu.matmul %14, %15, %cst_10 {dimension_numbers = #tpu.dot_dimension_numbers<[1], [0], [0], [1], [0, 0, 1, 1], [], []>} : vector<64x32xbf16>, vector<32x128xbf16>, vector<64x128xf32> -> vector<64x128xf32>
    %c0_11 = arith.constant 0 : index
    %c0_12 = arith.constant 0 : index
    %17 = vector.load %arg8[%c0_11, %c0_12] : memref<64x1xf32, #tpu.memory_space<vmem>>, vector<64x1xf32>
    %18 = vector.broadcast %17 : vector<64x1xf32> to vector<64x128xf32>
    %19 = arith.addf %16, %18 : vector<64x128xf32>
    %c0_13 = arith.constant 0 : index
    %c0_14 = arith.constant 0 : index
    %20 = vector.load %arg7[%c0_13, %c0_14] : memref<64x32xbf16, #tpu.memory_space<vmem>>, vector<64x32xbf16>
    %21 = vector.extract_strided_slice %13 {offsets = [32, 0], sizes = [32, 128], strides = [1, 1]} : vector<64x128xbf16> to vector<32x128xbf16>
    %cst_15 = arith.constant dense<0.000000e+00> : vector<64x128xf32>
    %22 = tpu.matmul %20, %21, %cst_15 {dimension_numbers = #tpu.dot_dimension_numbers<[1], [0], [0], [1], [0, 0, 1, 1], [], []>} : vector<64x32xbf16>, vector<32x128xbf16>, vector<64x128xf32> -> vector<64x128xf32>
    %c0_16 = arith.constant 0 : index
    %c0_17 = arith.constant 0 : index
    %23 = vector.load %arg9[%c0_16, %c0_17] : memref<64x1xf32, #tpu.memory_space<vmem>>, vector<64x1xf32>
    %24 = vector.broadcast %23 : vector<64x1xf32> to vector<64x128xf32>
    %25 = arith.addf %22, %24 : vector<64x128xf32>
    %c0_18 = arith.constant 0 : index
    %c0_19 = arith.constant 0 : index
    %c0_20 = arith.constant 0 : index
    %26 = vector.load %arg2[%c0_18, %c0_19, %c0_20] : memref<1x64x128xf32, #tpu.memory_space<vmem>>, vector<1x64x128xf32>
    %27 = vector.shape_cast %26 : vector<1x64x128xf32> to vector<64x128xf32>
    %28 = arith.mulf %27, %19 : vector<64x128xf32>
    %29 = arith.addf %28, %25 : vector<64x128xf32>
    %c0_21 = arith.constant 0 : index
    %c0_22 = arith.constant 0 : index
    %c0_23 = arith.constant 0 : index
    %30 = vector.load %arg10[%c0_21, %c0_22, %c0_23] : memref<1x64x128xf32, #tpu.memory_space<vmem>>, vector<1x64x128xf32>
    %31 = vector.shape_cast %30 : vector<1x64x128xf32> to vector<64x128xf32>
    %32 = vector.shape_cast %29 : vector<64x128xf32> to vector<1x64x128xf32>
    tpu.vector_store %arg10[%c0_21, %c0_22, %c0_23], %32 {strides = array<i32>} : memref<1x64x128xf32, #tpu.memory_space<vmem>>, vector<1x64x128xf32>,
    return
  }
  func.func @transform_0(%arg0: i32, %arg1: i32) -> (i32, i32, i32) {
    %c0_i32 = arith.constant 0 : i32
    %c0_i32_0 = arith.constant 0 : i32
    return %arg0, %c0_i32, %arg1 : i32, i32, i32
  }
  func.func @transform_1(%arg0: i32, %arg1: i32) -> (i32, i32, i32) {
    %c0_i32 = arith.constant 0 : i32
    %c0_i32_0 = arith.constant 0 : i32
    return %arg0, %c0_i32, %arg1 : i32, i32, i32
  }
  func.func @transform_2(%arg0: i32, %arg1: i32) -> (i32, i32) {
    %c0_i32 = arith.constant 0 : i32
    %c0_i32_0 = arith.constant 0 : i32
    %c0_i32_1 = arith.constant 0 : i32
    return %c0_i32, %c0_i32_0 : i32, i32
  }
  func.func @transform_3(%arg0: i32, %arg1: i32) -> (i32, i32) {
    %c0_i32 = arith.constant 0 : i32
    %c0_i32_0 = arith.constant 0 : i32
    %c0_i32_1 = arith.constant 0 : i32
    return %c0_i32, %c0_i32_0 : i32, i32
  }
  func.func @transform_4(%arg0: i32, %arg1: i32) -> (i32, i32) {
    %c0_i32 = arith.constant 0 : i32
    %c0_i32_0 = arith.constant 0 : i32
    %c0_i32_1 = arith.constant 0 : i32
    return %c0_i32, %c0_i32_0 : i32, i32
  }
  func.func @transform_5(%arg0: i32, %arg1: i32) -> (i32, i32) {
    %c0_i32 = arith.constant 0 : i32
    %c0_i32_0 = arith.constant 0 : i32
    %c0_i32_1 = arith.constant 0 : i32
    return %c0_i32, %c0_i32_0 : i32, i32
  }
  func.func @transform_6(%arg0: i32, %arg1: i32) -> (i32, i32) {
    %c0_i32 = arith.constant 0 : i32
    %c0_i32_0 = arith.constant 0 : i32
    %c0_i32_1 = arith.constant 0 : i32
    return %c0_i32, %c0_i32_0 : i32, i32
  }
  func.func @transform_7(%arg0: i32, %arg1: i32) -> (i32, i32) {
    %c0_i32 = arith.constant 0 : i32
    %c0_i32_0 = arith.constant 0 : i32
    %c0_i32_1 = arith.constant 0 : i32
    return %c0_i32, %c0_i32_0 : i32, i32
  }
  func.func @transform_8(%arg0: i32, %arg1: i32) -> (i32, i32, i32) {
    %c0_i32 = arith.constant 0 : i32
    %c0_i32_0 = arith.constant 0 : i32
    return %arg0, %c0_i32, %arg1 : i32, i32, i32
  }
}

</mosaic_0001>

<llo_original>
// kernel: sft_layer.1
$region0: #{sft_layer.1}
  #allocation0 [shape = 'u32[]', space=smem, size = 0x4, offset = 0x4, fixed_abs, tag = 'smem constant byte address 0x4 - core index']
  #allocation1 [shape = 'u32[144,128]{1,0:T(1,128)}', space=vmem, size = 0x12000, scoped, tag = 'internal scratch']
  %s0 = inlined_call_operand.vmem [shape: f32[2,64,256], index: 0, kind: input, shape index: {}]
  %s1 = inlined_call_operand.vmem [shape: f32[2,32,256], index: 1, kind: input, shape index: {}]
  %s2 = inlined_call_operand.vmem [shape: bf16[64,32], index: 2, kind: input, shape index: {}]
  %s3 = inlined_call_operand.vmem [shape: f32[64,1], index: 3, kind: input, shape index: {}]
  %s4 = inlined_call_operand.vmem [shape: bf16[64,32], index: 4, kind: input, shape index: {}]
  %s5 = inlined_call_operand.vmem [shape: bf16[64,32], index: 5, kind: input, shape index: {}]
  %s6 = inlined_call_operand.vmem [shape: f32[64,1], index: 6, kind: input, shape index: {}]
  %s7 = inlined_call_operand.vmem [shape: f32[64,1], index: 7, kind: input, shape index: {}]
  %s8 = inlined_call_operand.vmem [shape: f32[2,64,256], index: 8, kind: output, shape index: {}]
  %s9 = sld [smem:[#allocation0]]
  $region175: #{sft_layer.1} parent=0
    _
  %s11 = ssub.s32 1, %s9
  %s12 = scalar_select 0, %s11, %s9
  $region1: #{sft_layer.1} parent=0
    #allocation2 [shape = 'u8[65536]{0}', space=vmem, size = 0x10000, scoped, tag = 'input window, operand 0']
    #allocation3 [shape = 'u8[32768]{0}', space=vmem, size = 0x8000, scoped, tag = 'input window, operand 1']
    #allocation4 [shape = 'u8[65536]{0}', space=vmem, size = 0x10000, scoped, tag = 'output window, operand 0']
    loop: start=0, step=1, limit=6
    $region2: #{sft_layer.1} parent=1 // loop_pre_header
      _
    $region3: #{sft_layer.1} parent=1 // loop_header
      %s14 = sphi 0, %s18
      %p15 = scmp.ge.s32.totalorder %s14, 6
      %s21 = sphi 0, %s33
      %s22 = sphi 0, %s29
      %s23 = sphi 0, %s21
      %s24 = sphi 0, %s22
      %s25 = sphi 0, %s23
      %s26 = sphi 0, %s24
      %s38 = sphi 0, %s40
      %s41 = sphi 0, %s38
      %s42 = sphi 0, %s41
      %s58 = sphi 0, %s42
      %s66 = sphi 0, %s68
      %s69 = sphi 0, %s66
      %s70 = sphi 0, %s69
      %s86 = sphi 0, %s70
      %s90 = sphi 0, %s90
      %s92 = sphi 0, %s90
      %s93 = sphi 0, %s92
      %s107 = sphi 0, %s93
      %s111 = sphi 0, %s111
      %s113 = sphi 0, %s111
      %s114 = sphi 0, %s113
      %s128 = sphi 0, %s114
      %s132 = sphi 0, %s132
      %s134 = sphi 0, %s132
      %s135 = sphi 0, %s134
      %s149 = sphi 0, %s135
      %s153 = sphi 0, %s153
      %s155 = sphi 0, %s153
      %s156 = sphi 0, %s155
      %s170 = sphi 0, %s156
      %s174 = sphi 0, %s174
      %s176 = sphi 0, %s174
      %s177 = sphi 0, %s176
      %s191 = sphi 0, %s177
      %s195 = sphi 0, %s195
      %s197 = sphi 0, %s195
      %s198 = sphi 0, %s197
      %s212 = sphi 0, %s198
      %s220 = sphi 0, %s222
      %s223 = sphi 0, %s220
      %s224 = sphi 0, %s223
      %s240 = sphi 0, %s224
    $region4: #{sft_layer.1} parent=1 // loop_header_branch
      %17 = sbr.rel (%p15) target = $region8
    $region5: #{sft_layer.1} parent=1 // loop_body
      %s19 = ssub.s32 %s14, 1
      %s20 = ssub.s32 %s14, 2
      %s27 = sadd.s32 1, %s22
      %p28 = scmp.ge.s32.totalorder %s27, 2
      %s29 = scalar_select %p28, 0, %s27
      %s30 = sadd.s32 1, %s21
      %s31 = scalar_select %p28, %s30, %s21
      %p32 = scmp.ge.s32.totalorder %s31, 2
      %s33 = scalar_select %p32, 0, %s31
      %s34 = ssub.s32 %s21, %s33
      %s35 = ssub.s32 %s22, %s29
      %s36 = sor.u32 %s34, %s35
      %p37 = scmp.eq.s32.totalorder %s36, 0
      %s39 = sadd.s32 %s38, 1
      %s40 = scalar_select %p37, %s38, %s39
      %p43 = pneg %p37
      %p44 = scmp.eq.s32.totalorder %s14, 3
      %p45 = por %p43, %p44
      %p46 = scmp.ne.s32.totalorder %s38, %s41
      %p47 = scmp.eq.s32.totalorder %s14, 0
      %p48 = por %p46, %p47
      %p49 = scmp.ne.s32.totalorder %s38, %s41
      %p50 = scmp.eq.s32.totalorder %s19, 3
      %p51 = por %p49, %p50
      %p52 = scmp.ne.s32.totalorder %s41, %s42
      %p53 = scmp.eq.s32.totalorder %s19, 0
      %p54 = por %p52, %p53
      %p55 = scmp.ne.s32.totalorder %s41, %s42
      %p56 = scmp.eq.s32.totalorder %s20, 3
      %p57 = por %p55, %p56
      %p59 = scmp.ne.s32.totalorder %s42, %s58
      %p60 = scmp.eq.s32.totalorder %s20, 0
      %p61 = por %p59, %p60
      %s62 = ssub.s32 %s21, %s33
      %s63 = ssub.s32 %s22, %s29
      %s64 = sor.u32 %s62, %s63
      %p65 = scmp.eq.s32.totalorder %s64, 0
      %s67 = sadd.s32 %s66, 1
      %s68 = scalar_select %p65, %s66, %s67
      %p71 = pneg %p65
      %p72 = scmp.eq.s32.totalorder %s14, 3
      %p73 = por %p71, %p72
      %p74 = scmp.ne.s32.totalorder %s66, %s69
      %p75 = scmp.eq.s32.totalorder %s14, 0
      %p76 = por %p74, %p75
      %p77 = scmp.ne.s32.totalorder %s66, %s69
      %p78 = scmp.eq.s32.totalorder %s19, 3
      %p79 = por %p77, %p78
      %p80 = scmp.ne.s32.totalorder %s69, %s70
      %p81 = scmp.eq.s32.totalorder %s19, 0
      %p82 = por %p80, %p81
      %p83 = scmp.ne.s32.totalorder %s69, %s70
      %p84 = scmp.eq.s32.totalorder %s20, 3
      %p85 = por %p83, %p84
      %p87 = scmp.ne.s32.totalorder %s70, %s86
      %p88 = scmp.eq.s32.totalorder %s20, 0
      %p89 = por %p87, %p88
      %s91 = sadd.s32 %s90, 1
      %p94 = scmp.eq.s32.totalorder %s14, 3
      %p95 = scmp.ne.s32.totalorder %s90, %s92
      %p96 = scmp.eq.s32.totalorder %s14, 0
      %p97 = por %p95, %p96
      %p98 = scmp.ne.s32.totalorder %s90, %s92
      %p99 = scmp.eq.s32.totalorder %s19, 3
      %p100 = por %p98, %p99
      %p101 = scmp.ne.s32.totalorder %s92, %s93
      %p102 = scmp.eq.s32.totalorder %s19, 0
      %p103 = por %p101, %p102
      %p104 = scmp.ne.s32.totalorder %s92, %s93
      %p105 = scmp.eq.s32.totalorder %s20, 3
      %p106 = por %p104, %p105
      %p108 = scmp.ne.s32.totalorder %s93, %s107
      %p109 = scmp.eq.s32.totalorder %s20, 0
      %p110 = por %p108, %p109
      %s112 = sadd.s32 %s111, 1
      %p115 = scmp.eq.s32.totalorder %s14, 3
      %p116 = scmp.ne.s32.totalorder %s111, %s113
      %p117 = scmp.eq.s32.totalorder %s14, 0
      %p118 = por %p116, %p117
      %p119 = scmp.ne.s32.totalorder %s111, %s113
      %p120 = scmp.eq.s32.totalorder %s19, 3
      %p121 = por %p119, %p120
      %p122 = scmp.ne.s32.totalorder %s113, %s114
      %p123 = scmp.eq.s32.totalorder %s19, 0
      %p124 = por %p122, %p123
      %p125 = scmp.ne.s32.totalorder %s113, %s114
      %p126 = scmp.eq.s32.totalorder %s20, 3
      %p127 = por %p125, %p126
      %p129 = scmp.ne.s32.totalorder %s114, %s128
      %p130 = scmp.eq.s32.totalorder %s20, 0
      %p131 = por %p129, %p130
      %s133 = sadd.s32 %s132, 1
      %p136 = scmp.eq.s32.totalorder %s14, 3
      %p137 = scmp.ne.s32.totalorder %s132, %s134
      %p138 = scmp.eq.s32.totalorder %s14, 0
      %p139 = por %p137, %p138
      %p140 = scmp.ne.s32.totalorder %s132, %s134
      %p141 = scmp.eq.s32.totalorder %s19, 3
      %p142 = por %p140, %p141
      %p143 = scmp.ne.s32.totalorder %s134, %s135
      %p144 = scmp.eq.s32.totalorder %s19, 0
      %p145 = por %p143, %p144
      %p146 = scmp.ne.s32.totalorder %s134, %s135
      %p147 = scmp.eq.s32.totalorder %s20, 3
      %p148 = por %p146, %p147
      %p150 = scmp.ne.s32.totalorder %s135, %s149
      %p151 = scmp.eq.s32.totalorder %s20, 0
      %p152 = por %p150, %p151
      %s154 = sadd.s32 %s153, 1
      %p157 = scmp.eq.s32.totalorder %s14, 3
      %p158 = scmp.ne.s32.totalorder %s153, %s155
      %p159 = scmp.eq.s32.totalorder %s14, 0
      %p160 = por %p158, %p159
      %p161 = scmp.ne.s32.totalorder %s153, %s155
      %p162 = scmp.eq.s32.totalorder %s19, 3
      %p163 = por %p161, %p162
      %p164 = scmp.ne.s32.totalorder %s155, %s156
      %p165 = scmp.eq.s32.totalorder %s19, 0
      %p166 = por %p164, %p165
      %p167 = scmp.ne.s32.totalorder %s155, %s156
      %p168 = scmp.eq.s32.totalorder %s20, 3
      %p169 = por %p167, %p168
      %p171 = scmp.ne.s32.totalorder %s156, %s170
      %p172 = scmp.eq.s32.totalorder %s20, 0
      %p173 = por %p171, %p172
      %s175 = sadd.s32 %s174, 1
      %p178 = scmp.eq.s32.totalorder %s14, 3
      %p179 = scmp.ne.s32.totalorder %s174, %s176
      %p180 = scmp.eq.s32.totalorder %s14, 0
      %p181 = por %p179, %p180
      %p182 = scmp.ne.s32.totalorder %s174, %s176
      %p183 = scmp.eq.s32.totalorder %s19, 3
      %p184 = por %p182, %p183
      %p185 = scmp.ne.s32.totalorder %s176, %s177
      %p186 = scmp.eq.s32.totalorder %s19, 0
      %p187 = por %p185, %p186
      %p188 = scmp.ne.s32.totalorder %s176, %s177
      %p189 = scmp.eq.s32.totalorder %s20, 3
      %p190 = por %p188, %p189
      %p192 = scmp.ne.s32.totalorder %s177, %s191
      %p193 = scmp.eq.s32.totalorder %s20, 0
      %p194 = por %p192, %p193
      %s196 = sadd.s32 %s195, 1
      %p199 = scmp.eq.s32.totalorder %s14, 3
      %p200 = scmp.ne.s32.totalorder %s195, %s197
      %p201 = scmp.eq.s32.totalorder %s14, 0
      %p202 = por %p200, %p201
      %p203 = scmp.ne.s32.totalorder %s195, %s197
      %p204 = scmp.eq.s32.totalorder %s19, 3
      %p205 = por %p203, %p204
      %p206 = scmp.ne.s32.totalorder %s197, %s198
      %p207 = scmp.eq.s32.totalorder %s19, 0
      %p208 = por %p206, %p207
      %p209 = scmp.ne.s32.totalorder %s197, %s198
      %p210 = scmp.eq.s32.totalorder %s20, 3
      %p211 = por %p209, %p210
      %p213 = scmp.ne.s32.totalorder %s198, %s212
      %p214 = scmp.eq.s32.totalorder %s20, 0
      %p215 = por %p213, %p214
      %s216 = ssub.s32 %s21, %s33
      %s217 = ssub.s32 %s22, %s29
      %s218 = sor.u32 %s216, %s217
      %p219 = scmp.eq.s32.totalorder %s218, 0
      %s221 = sadd.s32 %s220, 1
      %s222 = scalar_select %p219, %s220, %s221
      %p225 = pneg %p219
      %p226 = scmp.eq.s32.totalorder %s14, 3
      %p227 = por %p225, %p226
      %p228 = scmp.ne.s32.totalorder %s220, %s223
      %p229 = scmp.eq.s32.totalorder %s14, 0
      %p230 = por %p228, %p229
      %p231 = scmp.ne.s32.totalorder %s220, %s223
      %p232 = scmp.eq.s32.totalorder %s19, 3
      %p233 = por %p231, %p232
      %p234 = scmp.ne.s32.totalorder %s223, %s224
      %p235 = scmp.eq.s32.totalorder %s19, 0
      %p236 = por %p234, %p235
      %p237 = scmp.ne.s32.totalorder %s223, %s224
      %p238 = scmp.eq.s32.totalorder %s20, 3
      %p239 = por %p237, %p238
      %p241 = scmp.ne.s32.totalorder %s224, %s240
      %p242 = scmp.eq.s32.totalorder %s20, 0
      %p243 = por %p241, %p242
      %p244 = scmp.le.s32.totalorder 1, %s14
      %p245 = scmp.lt.s32.totalorder %s14, 5
      %p246 = pnand %p244, %p245
      %p247 = pneg %p246
      // Predicated region
      $region9: #{sft_layer.1} parent=5 // pred_check
        _
      $region10: #{sft_layer.1} parent=5 // pred_check_branch
        %249 = sbr.rel (%p246) target = $region12
      $region11: #{sft_layer.1} parent=5 // pred_region
        %s250 = ssub.s32 %s14, 1
        // Predicated region
        $region13: #{sft_layer.1} parent=11 // pred_check
          %p251 = pneg %p103
        $region14: #{sft_layer.1} parent=11 // pred_check_branch
          %253 = sbr.rel (%p251) target = $region16
        $region15: #{sft_layer.1} parent=11 // pred_region
          _
        $region16: #{sft_layer.1} parent=11 // pred_fallthru
          _
        // Predicated region
        $region17: #{sft_layer.1} parent=11 // pred_check
          %p254 = pneg %p124
        $region18: #{sft_layer.1} parent=11 // pred_check_branch
          %256 = sbr.rel (%p254) target = $region20
        $region19: #{sft_layer.1} parent=11 // pred_region
          _
        $region20: #{sft_layer.1} parent=11 // pred_fallthru
          _
        // Predicated region
        $region21: #{sft_layer.1} parent=11 // pred_check
          %p257 = pneg %p145
        $region22: #{sft_layer.1} parent=11 // pred_check_branch
          %259 = sbr.rel (%p257) target = $region24
        $region23: #{sft_layer.1} parent=11 // pred_region
          _
        $region24: #{sft_layer.1} parent=11 // pred_fallthru
          _
        // Predicated region
        $region25: #{sft_layer.1} parent=11 // pred_check
          %p260 = pneg %p166
        $region26: #{sft_layer.1} parent=11 // pred_check_branch
          %262 = sbr.rel (%p260) target = $region28
        $region27: #{sft_layer.1} parent=11 // pred_region
          _
        $region28: #{sft_layer.1} parent=11 // pred_fallthru
          _
        // Predicated region
        $region29: #{sft_layer.1} parent=11 // pred_check
          %p263 = pneg %p187
        $region30: #{sft_layer.1} parent=11 // pred_check_branch
          %265 = sbr.rel (%p263) target = $region32
        $region31: #{sft_layer.1} parent=11 // pred_region
          _
        $region32: #{sft_layer.1} parent=11 // pred_fallthru
          _
        // Predicated region
        $region33: #{sft_layer.1} parent=11 // pred_check
          %p266 = pneg %p208
        $region34: #{sft_layer.1} parent=11 // pred_check_branch
          %268 = sbr.rel (%p266) target = $region36
        $region35: #{sft_layer.1} parent=11 // pred_region
          _
        $region36: #{sft_layer.1} parent=11 // pred_fallthru
          _
      $region12: #{sft_layer.1} parent=5 // pred_fallthru
        _
      %p269 = scmp.lt.s32.totalorder %s14, 4
      // Predicated region
      $region37: #{sft_layer.1} parent=5 // pred_check
        %p270 = pneg %p269
      $region38: #{sft_layer.1} parent=5 // pred_check_branch
        %272 = sbr.rel (%p270) target = $region40
      $region39: #{sft_layer.1} parent=5 // pred_region
        // Predicated region
        $region41: #{sft_layer.1} parent=39 // pred_check
          %p273 = pneg %p48
        $region42: #{sft_layer.1} parent=39 // pred_check_branch
          %275 = sbr.rel (%p273) target = $region44
        $region43: #{sft_layer.1} parent=39 // pred_region
          %s276 = sand.u32 %s38, 1
          %s277 = sand.u32 %s38, 1
          %s278 = smul.addr %s277, 64
          %s279 = scalar_lea.vmem [#allocation2], %s278
          %s280 = smul.addr %s21, 16
          %s281 = sadd.s32 %s22, %s280
          %s282 = smul.addr %s281, 8
          %s283 = scalar_lea.vmem %s0, %s282
          // Predicated region
          $region45: #{sft_layer.1} parent=43 // pred_check
            _
          $region46: #{sft_layer.1} parent=43 // pred_check_branch
            %285 = sbr.rel (0) target = $region48
          $region47: #{sft_layer.1} parent=43 // pred_region
            // Predicated region
            $region49: #{sft_layer.1} parent=47 // pred_check
              _
            $region50: #{sft_layer.1} parent=47 // pred_check_branch
              %287 = sbr.rel (0) target = $region52
            $region51: #{sft_layer.1} parent=47 // pred_region
              // Predicated region
              $region64: #{sft_layer.1} parent=51 // pred_check
                _
              $region65: #{sft_layer.1} parent=51 // pred_check_branch
                %316 = sbr.rel (0) target = $region67
              $region66: #{sft_layer.1} parent=51 // pred_region
                loop: start=0, step=1, limit=1
                $region68: #{sft_layer.1} parent=66 // loop_pre_header
                  _
                $region69: #{sft_layer.1} parent=66 // loop_header
                  %s318 = sphi 0, %s322
                  %p319 = scmp.ge.s32.totalorder %s318, 1
                  %s323 = sphi %s283, %s283
                  %s324 = sphi %s279, %s279
                $region70: #{sft_layer.1} parent=66 // loop_header_branch
                  %321 = sbr.rel (%p319) target = $region74
                $region71: #{sft_layer.1} parent=66 // loop_body
                  %v325 = vld [vmem:[%s323] sm:$0xff]
                  %326 = vst [vmem:[%s324] sm:$0xff] %v325
                  %v327 = vld [vmem:[%s323 + $0x10] sm:$0xff]
                  %328 = vst [vmem:[%s324 + $0x8] sm:$0xff] %v327
                  %v329 = vld [vmem:[%s323 + $0x20] sm:$0xff]
                  %330 = vst [vmem:[%s324 + $0x10] sm:$0xff] %v329
                  %v331 = vld [vmem:[%s323 + $0x30] sm:$0xff]
                  %332 = vst [vmem:[%s324 + $0x18] sm:$0xff] %v331
                  %v333 = vld [vmem:[%s323 + $0x40] sm:$0xff]
                  %334 = vst [vmem:[%s324 + $0x20] sm:$0xff] %v333
                  %v335 = vld [vmem:[%s323 + $0x50] sm:$0xff]
                  %336 = vst [vmem:[%s324 + $0x28] sm:$0xff] %v335
                  %v337 = vld [vmem:[%s323 + $0x60] sm:$0xff]
                  %338 = vst [vmem:[%s324 + $0x30] sm:$0xff] %v337
                  %v339 = vld [vmem:[%s323 + $0x70] sm:$0xff]
                  %340 = vst [vmem:[%s324 + $0x38] sm:$0xff] %v339
                $region72: #{sft_layer.1} parent=66 // loop_footer
                  %s322 = sadd.s32 1, %s318
                $region73: #{sft_layer.1} parent=66 // loop_footer_branch
                  %317 = sbr.rel target = $region69
                $region74: #{sft_layer.1} parent=66 // loop_exit
                  _
              $region67: #{sft_layer.1} parent=51 // pred_fallthru
                _
              // Predicated region
              $region75: #{sft_layer.1} parent=51 // pred_check
                _
              $region76: #{sft_layer.1} parent=51 // pred_check_branch
                %342 = sbr.rel target = $region78
              $region77: #{sft_layer.1} parent=51 // pred_region
                _
              $region78: #{sft_layer.1} parent=51 // pred_fallthru
                _
            $region52: #{sft_layer.1} parent=47 // pred_fallthru
              _
            // Predicated region
            $region53: #{sft_layer.1} parent=47 // pred_check
              _
            $region54: #{sft_layer.1} parent=47 // pred_check_branch
              %289 = sbr.rel target = $region56
            $region55: #{sft_layer.1} parent=47 // pred_region
              loop: start=0, step=1, limit=1
              $region57: #{sft_layer.1} parent=55 // loop_pre_header
                _
              $region58: #{sft_layer.1} parent=55 // loop_header
                %s292 = sphi 0, %s296
                %p293 = scmp.ge.s32.totalorder %s292, 1
                %s297 = sphi %s283, %s283
                %s298 = sphi %s279, %s279
              $region59: #{sft_layer.1} parent=55 // loop_header_branch
                %295 = sbr.rel (%p293) target = $region63
              $region60: #{sft_layer.1} parent=55 // loop_body
                %v299 = vld [vmem:[%s297] sm:$0xff]
                %300 = vst [vmem:[%s298] sm:$0xff] %v299
                %v301 = vld [vmem:[%s297 + $0x10] sm:$0xff]
                %302 = vst [vmem:[%s298 + $0x8] sm:$0xff] %v301
                %v303 = vld [vmem:[%s297 + $0x20] sm:$0xff]
                %304 = vst [vmem:[%s298 + $0x10] sm:$0xff] %v303
                %v305 = vld [vmem:[%s297 + $0x30] sm:$0xff]
                %306 = vst [vmem:[%s298 + $0x18] sm:$0xff] %v305
                %v307 = vld [vmem:[%s297 + $0x40] sm:$0xff]
                %308 = vst [vmem:[%s298 + $0x20] sm:$0xff] %v307
                %v309 = vld [vmem:[%s297 + $0x50] sm:$0xff]
                %310 = vst [vmem:[%s298 + $0x28] sm:$0xff] %v309
                %v311 = vld [vmem:[%s297 + $0x60] sm:$0xff]
                %312 = vst [vmem:[%s298 + $0x30] sm:$0xff] %v311
                %v313 = vld [vmem:[%s297 + $0x70] sm:$0xff]
                %314 = vst [vmem:[%s298 + $0x38] sm:$0xff] %v313
              $region61: #{sft_layer.1} parent=55 // loop_footer
                %s296 = sadd.s32 1, %s292
              $region62: #{sft_layer.1} parent=55 // loop_footer_branch
                %291 = sbr.rel target = $region58
              $region63: #{sft_layer.1} parent=55 // loop_exit
                _
            $region56: #{sft_layer.1} parent=47 // pred_fallthru
              _
          $region48: #{sft_layer.1} parent=43 // pred_fallthru
            _
          %343 = vnop
        $region44: #{sft_layer.1} parent=39 // pred_fallthru
          _
        // Predicated region
        $region79: #{sft_layer.1} parent=39 // pred_check
          %p344 = pneg %p76
        $region80: #{sft_layer.1} parent=39 // pred_check_branch
          %346 = sbr.rel (%p344) target = $region82
        $region81: #{sft_layer.1} parent=39 // pred_region
          %s347 = sand.u32 %s66, 1
          %s348 = sand.u32 %s66, 1
          %s349 = smul.addr %s348, 32
          %s350 = scalar_lea.vmem [#allocation3], %s349
          %s351 = smul.addr %s21, 8
          %s352 = sadd.s32 %s22, %s351
          %s353 = smul.addr %s352, 8
          %s354 = scalar_lea.vmem %s1, %s353
          // Predicated region
          $region83: #{sft_layer.1} parent=81 // pred_check
            _
          $region84: #{sft_layer.1} parent=81 // pred_check_branch
            %356 = sbr.rel (0) target = $region86
          $region85: #{sft_layer.1} parent=81 // pred_region
            // Predicated region
            $region87: #{sft_layer.1} parent=85 // pred_check
              _
            $region88: #{sft_layer.1} parent=85 // pred_check_branch
              %358 = sbr.rel (0) target = $region90
            $region89: #{sft_layer.1} parent=85 // pred_region
              // Predicated region
              $region102: #{sft_layer.1} parent=89 // pred_check
                _
              $region103: #{sft_layer.1} parent=89 // pred_check_branch
                %379 = sbr.rel (0) target = $region105
              $region104: #{sft_layer.1} parent=89 // pred_region
                loop: start=0, step=1, limit=1
                $region106: #{sft_layer.1} parent=104 // loop_pre_header
                  _
                $region107: #{sft_layer.1} parent=104 // loop_header
                  %s381 = sphi 0, %s385
                  %p382 = scmp.ge.s32.totalorder %s381, 1
                  %s386 = sphi %s354, %s354
                  %s387 = sphi %s350, %s350
                $region108: #{sft_layer.1} parent=104 // loop_header_branch
                  %384 = sbr.rel (%p382) target = $region112
                $region109: #{sft_layer.1} parent=104 // loop_body
                  %v388 = vld [vmem:[%s386] sm:$0xff]
                  %389 = vst [vmem:[%s387] sm:$0xff] %v388
                  %v390 = vld [vmem:[%s386 + $0x10] sm:$0xff]
                  %391 = vst [vmem:[%s387 + $0x8] sm:$0xff] %v390
                  %v392 = vld [vmem:[%s386 + $0x20] sm:$0xff]
                  %393 = vst [vmem:[%s387 + $0x10] sm:$0xff] %v392
                  %v394 = vld [vmem:[%s386 + $0x30] sm:$0xff]
                  %395 = vst [vmem:[%s387 + $0x18] sm:$0xff] %v394
                $region110: #{sft_layer.1} parent=104 // loop_footer
                  %s385 = sadd.s32 1, %s381
                $region111: #{sft_layer.1} parent=104 // loop_footer_branch
                  %380 = sbr.rel target = $region107
                $region112: #{sft_layer.1} parent=104 // loop_exit
                  _
              $region105: #{sft_layer.1} parent=89 // pred_fallthru
                _
              // Predicated region
              $region113: #{sft_layer.1} parent=89 // pred_check
                _
              $region114: #{sft_layer.1} parent=89 // pred_check_branch
                %397 = sbr.rel target = $region116
              $region115: #{sft_layer.1} parent=89 // pred_region
                _
              $region116: #{sft_layer.1} parent=89 // pred_fallthru
                _
            $region90: #{sft_layer.1} parent=85 // pred_fallthru
              _
            // Predicated region
            $region91: #{sft_layer.1} parent=85 // pred_check
              _
            $region92: #{sft_layer.1} parent=85 // pred_check_branch
              %360 = sbr.rel target = $region94
            $region93: #{sft_layer.1} parent=85 // pred_region
              loop: start=0, step=1, limit=1
              $region95: #{sft_layer.1} parent=93 // loop_pre_header
                _
              $region96: #{sft_layer.1} parent=93 // loop_header
                %s363 = sphi 0, %s367
                %p364 = scmp.ge.s32.totalorder %s363, 1
                %s368 = sphi %s354, %s354
                %s369 = sphi %s350, %s350
              $region97: #{sft_layer.1} parent=93 // loop_header_branch
                %366 = sbr.rel (%p364) target = $region101
              $region98: #{sft_layer.1} parent=93 // loop_body
                %v370 = vld [vmem:[%s368] sm:$0xff]
                %371 = vst [vmem:[%s369] sm:$0xff] %v370
                %v372 = vld [vmem:[%s368 + $0x10] sm:$0xff]
                %373 = vst [vmem:[%s369 + $0x8] sm:$0xff] %v372
                %v374 = vld [vmem:[%s368 + $0x20] sm:$0xff]
                %375 = vst [vmem:[%s369 + $0x10] sm:$0xff] %v374
                %v376 = vld [vmem:[%s368 + $0x30] sm:$0xff]
                %377 = vst [vmem:[%s369 + $0x18] sm:$0xff] %v376
              $region99: #{sft_layer.1} parent=93 // loop_footer
                %s367 = sadd.s32 1, %s363
              $region100: #{sft_layer.1} parent=93 // loop_footer_branch
                %362 = sbr.rel target = $region96
              $region101: #{sft_layer.1} parent=93 // loop_exit
                _
            $region94: #{sft_layer.1} parent=85 // pred_fallthru
              _
          $region86: #{sft_layer.1} parent=81 // pred_fallthru
            _
          %398 = vnop
        $region82: #{sft_layer.1} parent=39 // pred_fallthru
          _
      $region40: #{sft_layer.1} parent=5 // pred_fallthru
        _
      %p399 = scmp.le.s32.totalorder 1, %s14
      %p400 = scmp.lt.s32.totalorder %s14, 5
      %p401 = pnand %p399, %p400
      %p402 = pneg %p401
      // Predicated region
      $region117: #{sft_layer.1} parent=5 // pred_check
        _
      $region118: #{sft_layer.1} parent=5 // pred_check_branch
        %404 = sbr.rel (%p401) target = $region120
      $region119: #{sft_layer.1} parent=5 // pred_region
        %s405 = ssub.s32 %s14, 1
        %s406 = sand.u32 %s41, 1
        %s407 = sand.u32 %s41, 1
        %s408 = smul.addr %s407, 64
        %s409 = scalar_lea.vmem [#allocation2], %s408
        // Predicated region
        $region121: #{sft_layer.1} parent=119 // pred_check
          %p410 = pneg %p54
        $region122: #{sft_layer.1} parent=119 // pred_check_branch
          %412 = sbr.rel (%p410) target = $region124
        $region123: #{sft_layer.1} parent=119 // pred_region
          _
        $region124: #{sft_layer.1} parent=119 // pred_fallthru
          _
        %s413 = sand.u32 %s69, 1
        %s414 = sand.u32 %s69, 1
        %s415 = smul.addr %s414, 32
        %s416 = scalar_lea.vmem [#allocation3], %s415
        // Predicated region
        $region125: #{sft_layer.1} parent=119 // pred_check
          %p417 = pneg %p82
        $region126: #{sft_layer.1} parent=119 // pred_check_branch
          %419 = sbr.rel (%p417) target = $region128
        $region127: #{sft_layer.1} parent=119 // pred_region
          _
        $region128: #{sft_layer.1} parent=119 // pred_fallthru
          _
        %s420 = sand.u32 %s41, 1
        %s421 = sand.u32 %s41, 1
        %s422 = smul.addr %s421, 64
        %s423 = scalar_lea.vmem [#allocation2], %s422
        %p424 = pneg %p54
        %p425 = pneg %p51
        %s426 = sand.u32 %s69, 1
        %s427 = sand.u32 %s69, 1
        %s428 = smul.addr %s427, 32
        %s429 = scalar_lea.vmem [#allocation3], %s428
        %p430 = pneg %p82
        %p431 = pneg %p79
        %p432 = pneg %p103
        %p433 = pneg %p100
        %p434 = pneg %p124
        %p435 = pneg %p121
        %p436 = pneg %p145
        %p437 = pneg %p142
        %p438 = pneg %p166
        %p439 = pneg %p163
        %p440 = pneg %p187
        %p441 = pneg %p184
        %p442 = pneg %p208
        %p443 = pneg %p205
        %p444 = pneg %p236
        %p445 = pneg %p233
        %s446 = sand.u32 %s223, 1
        %s447 = sand.u32 %s223, 1
        %s448 = smul.addr %s447, 64
        %s449 = scalar_lea.vmem [#allocation4], %s448
        %v451 = vld [vmem:[%s416] sm:$0xff]
        %v452 = vld [vmem:[%s416 + $0x8] sm:$0xff]
        %v453 = vld [vmem:[%s416 + $0x10] sm:$0xff]
        %v454 = vld [vmem:[%s416 + $0x18] sm:$0xff]
        %v455 = vpack.c.bf16 %v452, %v451
        %v456 = vpack.c.bf16 %v454, %v453
        %v457 = vld [vmem:[%s2] sm:$0xf]
        %v458 = vld [vmem:[%s2 + $0x4] sm:$0xf]
        %v459 = vld [vmem:[%s2 + $0x8] sm:$0xf]
        %v460 = vld [vmem:[%s2 + $0xc] sm:$0xf]
        %v461 = vld [vmem:[%s2 + $0x10] sm:$0xf]
        %v462 = vld [vmem:[%s2 + $0x14] sm:$0xf]
        %v463 = vld [vmem:[%s2 + $0x18] sm:$0xf]
        %v464 = vld [vmem:[%s2 + $0x1c] sm:$0xf]
        %v465 = vld [vmem:[%s3] sm:$0xff]
        %v466 = vld [vmem:[%s3 + $0x8] sm:$0xff]
        %v467 = vld [vmem:[%s3 + $0x10] sm:$0xff]
        %v468 = vld [vmem:[%s3 + $0x18] sm:$0xff]
        %v469 = vld [vmem:[%s3 + $0x20] sm:$0xff]
        %v470 = vld [vmem:[%s3 + $0x28] sm:$0xff]
        %v471 = vld [vmem:[%s3 + $0x30] sm:$0xff]
        %v472 = vld [vmem:[%s3 + $0x38] sm:$0xff]
        %474 = vset.pattern.permute.xlu0 0
        %475 = vperm.xlu0 %474, %v465
        %v476 = vpop.permute.xlu0 %475
        %479 = vset.pattern.permute.xlu0 0
        %480 = vperm.xlu0 %479, %v466
        %v481 = vpop.permute.xlu0 %480
        %484 = vset.pattern.permute.xlu0 0
        %485 = vperm.xlu0 %484, %v467
        %v486 = vpop.permute.xlu0 %485
        %489 = vset.pattern.permute.xlu0 0
        %490 = vperm.xlu0 %489, %v468
        %v491 = vpop.permute.xlu0 %490
        %494 = vset.pattern.permute.xlu0 0
        %495 = vperm.xlu0 %494, %v469
        %v496 = vpop.permute.xlu0 %495
        %499 = vset.pattern.permute.xlu0 0
        %500 = vperm.xlu0 %499, %v470
        %v501 = vpop.permute.xlu0 %500
        %504 = vset.pattern.permute.xlu0 0
        %505 = vperm.xlu0 %504, %v471
        %v506 = vpop.permute.xlu0 %505
        %509 = vset.pattern.permute.xlu0 0
        %510 = vperm.xlu0 %509, %v472
        %v511 = vpop.permute.xlu0 %510
        %v521 = vunpack.c.l.b16 %v457
        %v522 = vunpack.c.l.b16 %v458
        %v523 = vunpack.c.l.b16 %v459
        %v524 = vunpack.c.l.b16 %v460
        %v525 = vunpack.c.l.b16 %v461
        %v526 = vunpack.c.l.b16 %v462
        %v527 = vunpack.c.l.b16 %v463
        %v528 = vunpack.c.l.b16 %v464
        %v529 = vpack.c.b16 %v522, %v521
        %v530 = vpack.c.b16 %v524, %v523
        %v531 = vpack.c.b16 %v526, %v525
        %v532 = vpack.c.b16 %v528, %v527
        %vm533 = vcmask 261120
        %v535 = vsel %vm533, %v529, 0
        %v538 = vsel %vm533, %v530, 0
        %v541 = vsel %vm533, %v531, 0
        %v544 = vsel %vm533, %v532, 0
        %546 = vmatprep.subr.bf16.mxu0 0
        %547 = vmatpush1.bf16.msra.mxu0 %v455
        %548 = vmatprep.subr.bf16.mxu0 0
        %549 = vmatpush1.bf16.msra.mxu0 %v456
        %550 = vmatprep.subr.bf16.mxu0 0
        %551 = vmatpush1.bf16.msra.mxu0 0
        %552 = vmatprep.subr.bf16.mxu0 0
        %553 = vmatpush1.bf16.msra.mxu0 0
        %554 = vmatprep.subr.bf16.mxu0 0
        %555 = vmatpush1.bf16.msra.mxu0 0
        %556 = vmatprep.subr.bf16.mxu0 0
        %557 = vmatpush1.bf16.msra.mxu0 0
        %558 = vmatprep.subr.bf16.mxu0 0
        %559 = vmatpush1.bf16.msra.mxu0 0
        %560 = vmatprep.subr.bf16.mxu0 0
        %561 = vmatpush1.bf16.msra.mxu0 0
        %562 = vmatprep.subr.bf16.mxu0 0
        %563 = vmatpush1.bf16.msra.mxu0 0
        %564 = vmatprep.subr.bf16.mxu0 0
        %565 = vmatpush1.bf16.msra.mxu0 0
        %566 = vmatprep.subr.bf16.mxu0 0
        %567 = vmatpush1.bf16.msra.mxu0 0
        %568 = vmatprep.subr.bf16.mxu0 0
        %569 = vmatpush1.bf16.msra.mxu0 0
        %570 = vmatprep.subr.bf16.mxu0 0
        %571 = vmatpush1.bf16.msra.mxu0 0
        %572 = vmatprep.subr.bf16.mxu0 0
        %573 = vmatpush1.bf16.msra.mxu0 0
        %574 = vmatprep.subr.bf16.mxu0 0
        %575 = vmatpush1.bf16.msra.mxu0 0
        %576 = vmatprep.subr.bf16.mxu0 0
        %577 = vmatpush1.bf16.msra.mxu0 0
        %578 = vmatprep.mubr.bf16.mxu0 0
        %579 = vmatmul.mubr.bf16.gmra.mrb[0].mxu0 %v535
        %v580 = vpop.f32.mrb[0].mxu0
        %v581 = vadd.f32 %v476, %v580
        %v582 = vpop.f32.mrb[0].mxu0
        %v583 = vpop.f32.mrb[0].mxu0
        %v584 = vadd.f32 %v481, %v583
        %v585 = vpop.f32.mrb[0].mxu0
        %586 = vmatprep.mubr.bf16.mxu0 0
        %587 = vmatmul.mubr.bf16.gmra.mrb[0].mxu0 %v538
        %v588 = vpop.f32.mrb[0].mxu0
        %v589 = vadd.f32 %v486, %v588
        %v590 = vpop.f32.mrb[0].mxu0
        %v591 = vpop.f32.mrb[0].mxu0
        %v592 = vadd.f32 %v491, %v591
        %v593 = vpop.f32.mrb[0].mxu0
        %594 = vmatprep.mubr.bf16.mxu0 0
        %595 = vmatmul.mubr.bf16.gmra.mrb[0].mxu0 %v541
        %v596 = vpop.f32.mrb[0].mxu0
        %v597 = vadd.f32 %v496, %v596
        %v598 = vpop.f32.mrb[0].mxu0
        %v599 = vpop.f32.mrb[0].mxu0
        %v600 = vadd.f32 %v501, %v599
        %v601 = vpop.f32.mrb[0].mxu0
        %602 = vmatprep.mubr.bf16.mxu0 0
        %603 = vmatmul.mubr.bf16.gmra.mrb[0].mxu0 %v544
        %v604 = vpop.f32.mrb[0].mxu0
        %v605 = vadd.f32 %v506, %v604
        %v606 = vpop.f32.mrb[0].mxu0
        %v607 = vpop.f32.mrb[0].mxu0
        %v608 = vadd.f32 %v511, %v607
        %v609 = vpop.f32.mrb[0].mxu0
        %610 = vdwg.mxu0
        %vm611 = vcmp.ge.f32.partialorder %v581, 0.0
        %vm612 = vcmp.ge.f32.partialorder %v584, 0.0
        %vm613 = vcmp.ge.f32.partialorder %v589, 0.0
        %vm614 = vcmp.ge.f32.partialorder %v592, 0.0
        %vm615 = vcmp.ge.f32.partialorder %v597, 0.0
        %vm616 = vcmp.ge.f32.partialorder %v600, 0.0
        %vm617 = vcmp.ge.f32.partialorder %v605, 0.0
        %vm618 = vcmp.ge.f32.partialorder %v608, 0.0
        %v619 = vmul.f32 %v581, 0.01
        %v620 = vmul.f32 %v584, 0.01
        %v621 = vmul.f32 %v589, 0.01
        %v622 = vmul.f32 %v592, 0.01
        %v623 = vmul.f32 %v597, 0.01
        %v624 = vmul.f32 %v600, 0.01
        %v625 = vmul.f32 %v605, 0.01
        %v626 = vmul.f32 %v608, 0.01
        %v627 = vsel %vm611, %v581, %v619
        %v628 = vsel %vm612, %v584, %v620
        %v629 = vsel %vm613, %v589, %v621
        %v630 = vsel %vm614, %v592, %v622
        %v631 = vsel %vm615, %v597, %v623
        %v632 = vsel %vm616, %v600, %v624
        %v633 = vsel %vm617, %v605, %v625
        %v634 = vsel %vm618, %v608, %v626
        %v635 = vpack.c.bf16 %v628, %v627
        %v636 = vpack.c.bf16 %v630, %v629
        %v637 = vpack.c.bf16 %v632, %v631
        %v638 = vpack.c.bf16 %v634, %v633
        %v639 = vld [vmem:[%s4] sm:$0xf]
        %v640 = vld [vmem:[%s4 + $0x4] sm:$0xf]
        %v641 = vld [vmem:[%s4 + $0x8] sm:$0xf]
        %v642 = vld [vmem:[%s4 + $0xc] sm:$0xf]
        %v643 = vld [vmem:[%s4 + $0x10] sm:$0xf]
        %v644 = vld [vmem:[%s4 + $0x14] sm:$0xf]
        %v645 = vld [vmem:[%s4 + $0x18] sm:$0xf]
        %v646 = vld [vmem:[%s4 + $0x1c] sm:$0xf]
        %v647 = vld [vmem:[%s6] sm:$0xff]
        %v648 = vld [vmem:[%s6 + $0x8] sm:$0xff]
        %v649 = vld [vmem:[%s6 + $0x10] sm:$0xff]
        %v650 = vld [vmem:[%s6 + $0x18] sm:$0xff]
        %v651 = vld [vmem:[%s6 + $0x20] sm:$0xff]
        %v652 = vld [vmem:[%s6 + $0x28] sm:$0xff]
        %v653 = vld [vmem:[%s6 + $0x30] sm:$0xff]
        %v654 = vld [vmem:[%s6 + $0x38] sm:$0xff]
        %656 = vset.pattern.permute.xlu0 0
        %657 = vperm.xlu0 %656, %v647
        %v658 = vpop.permute.xlu0 %657
        %661 = vset.pattern.permute.xlu0 0
        %662 = vperm.xlu0 %661, %v648
        %v663 = vpop.permute.xlu0 %662
        %666 = vset.pattern.permute.xlu0 0
        %667 = vperm.xlu0 %666, %v649
        %v668 = vpop.permute.xlu0 %667
        %671 = vset.pattern.permute.xlu0 0
        %672 = vperm.xlu0 %671, %v650
        %v673 = vpop.permute.xlu0 %672
        %676 = vset.pattern.permute.xlu0 0
        %677 = vperm.xlu0 %676, %v651
        %v678 = vpop.permute.xlu0 %677
        %681 = vset.pattern.permute.xlu0 0
        %682 = vperm.xlu0 %681, %v652
        %v683 = vpop.permute.xlu0 %682
        %686 = vset.pattern.permute.xlu0 0
        %687 = vperm.xlu0 %686, %v653
        %v688 = vpop.permute.xlu0 %687
        %691 = vset.pattern.permute.xlu0 0
        %692 = vperm.xlu0 %691, %v654
        %v693 = vpop.permute.xlu0 %692
        %v703 = vunpack.c.l.b16 %v639
        %v704 = vunpack.c.l.b16 %v640
        %v705 = vunpack.c.l.b16 %v641
        %v706 = vunpack.c.l.b16 %v642
        %v707 = vunpack.c.l.b16 %v643
        %v708 = vunpack.c.l.b16 %v644
        %v709 = vunpack.c.l.b16 %v645
        %v710 = vunpack.c.l.b16 %v646
        %v711 = vpack.c.b16 %v704, %v703
        %v712 = vpack.c.b16 %v706, %v705
        %v713 = vpack.c.b16 %v708, %v707
        %v714 = vpack.c.b16 %v710, %v709
        %v716 = vsel %vm533, %v711, 0
        %v719 = vsel %vm533, %v712, 0
        %v722 = vsel %vm533, %v713, 0
        %v725 = vsel %vm533, %v714, 0
        %727 = vmatprep.subr.bf16.mxu0 0
        %728 = vmatpush1.bf16.msra.mxu0 %v635
        %729 = vmatprep.subr.bf16.mxu0 0
        %730 = vmatpush1.bf16.msra.mxu0 %v636
        %731 = vmatprep.subr.bf16.mxu0 0
        %732 = vmatpush1.bf16.msra.mxu0 0
        %733 = vmatprep.subr.bf16.mxu0 0
        %734 = vmatpush1.bf16.msra.mxu0 0
        %735 = vmatprep.subr.bf16.mxu0 0
        %736 = vmatpush1.bf16.msra.mxu0 0
        %737 = vmatprep.subr.bf16.mxu0 0
        %738 = vmatpush1.bf16.msra.mxu0 0
        %739 = vmatprep.subr.bf16.mxu0 0
        %740 = vmatpush1.bf16.msra.mxu0 0
        %741 = vmatprep.subr.bf16.mxu0 0
        %742 = vmatpush1.bf16.msra.mxu0 0
        %743 = vmatprep.subr.bf16.mxu0 0
        %744 = vmatpush1.bf16.msra.mxu0 0
        %745 = vmatprep.subr.bf16.mxu0 0
        %746 = vmatpush1.bf16.msra.mxu0 0
        %747 = vmatprep.subr.bf16.mxu0 0
        %748 = vmatpush1.bf16.msra.mxu0 0
        %749 = vmatprep.subr.bf16.mxu0 0
        %750 = vmatpush1.bf16.msra.mxu0 0
        %751 = vmatprep.subr.bf16.mxu0 0
        %752 = vmatpush1.bf16.msra.mxu0 0
        %753 = vmatprep.subr.bf16.mxu0 0
        %754 = vmatpush1.bf16.msra.mxu0 0
        %755 = vmatprep.subr.bf16.mxu0 0
        %756 = vmatpush1.bf16.msra.mxu0 0
        %757 = vmatprep.subr.bf16.mxu0 0
        %758 = vmatpush1.bf16.msra.mxu0 0
        %759 = vmatprep.mubr.bf16.mxu0 0
        %760 = vmatmul.mubr.bf16.gmra.mrb[0].mxu0 %v716
        %v761 = vpop.f32.mrb[0].mxu0
        %v762 = vadd.f32 %v658, %v761
        %v763 = vpop.f32.mrb[0].mxu0
        %v764 = vpop.f32.mrb[0].mxu0
        %v765 = vadd.f32 %v663, %v764
        %v766 = vpop.f32.mrb[0].mxu0
        %767 = vmatprep.mubr.bf16.mxu0 0
        %768 = vmatmul.mubr.bf16.gmra.mrb[0].mxu0 %v719
        %v769 = vpop.f32.mrb[0].mxu0
        %v770 = vadd.f32 %v668, %v769
        %v771 = vpop.f32.mrb[0].mxu0
        %v772 = vpop.f32.mrb[0].mxu0
        %v773 = vadd.f32 %v673, %v772
        %v774 = vpop.f32.mrb[0].mxu0
        %775 = vmatprep.mubr.bf16.mxu0 0
        %776 = vmatmul.mubr.bf16.gmra.mrb[0].mxu0 %v722
        %v777 = vpop.f32.mrb[0].mxu0
        %v778 = vadd.f32 %v678, %v777
        %v779 = vpop.f32.mrb[0].mxu0
        %v780 = vpop.f32.mrb[0].mxu0
        %v781 = vadd.f32 %v683, %v780
        %v782 = vpop.f32.mrb[0].mxu0
        %783 = vmatprep.mubr.bf16.mxu0 0
        %784 = vmatmul.mubr.bf16.gmra.mrb[0].mxu0 %v725
        %v785 = vpop.f32.mrb[0].mxu0
        %v786 = vadd.f32 %v688, %v785
        %v787 = vpop.f32.mrb[0].mxu0
        %v788 = vpop.f32.mrb[0].mxu0
        %v789 = vadd.f32 %v693, %v788
        %v790 = vpop.f32.mrb[0].mxu0
        %791 = vdwg.mxu0
        %v792 = vld [vmem:[%s5] sm:$0xf]
        %v793 = vld [vmem:[%s5 + $0x4] sm:$0xf]
        %v794 = vld [vmem:[%s5 + $0x8] sm:$0xf]
        %v795 = vld [vmem:[%s5 + $0xc] sm:$0xf]
        %v796 = vld [vmem:[%s5 + $0x10] sm:$0xf]
        %v797 = vld [vmem:[%s5 + $0x14] sm:$0xf]
        %v798 = vld [vmem:[%s5 + $0x18] sm:$0xf]
        %v799 = vld [vmem:[%s5 + $0x1c] sm:$0xf]
        %v800 = vld [vmem:[%s7] sm:$0xff]
        %v801 = vld [vmem:[%s7 + $0x8] sm:$0xff]
        %v802 = vld [vmem:[%s7 + $0x10] sm:$0xff]
        %v803 = vld [vmem:[%s7 + $0x18] sm:$0xff]
        %v804 = vld [vmem:[%s7 + $0x20] sm:$0xff]
        %v805 = vld [vmem:[%s7 + $0x28] sm:$0xff]
        %v806 = vld [vmem:[%s7 + $0x30] sm:$0xff]
        %v807 = vld [vmem:[%s7 + $0x38] sm:$0xff]
        %809 = vset.pattern.permute.xlu0 0
        %810 = vperm.xlu0 %809, %v800
        %v811 = vpop.permute.xlu0 %810
        %814 = vset.pattern.permute.xlu0 0
        %815 = vperm.xlu0 %814, %v801
        %v816 = vpop.permute.xlu0 %815
        %819 = vset.pattern.permute.xlu0 0
        %820 = vperm.xlu0 %819, %v802
        %v821 = vpop.permute.xlu0 %820
        %824 = vset.pattern.permute.xlu0 0
        %825 = vperm.xlu0 %824, %v803
        %v826 = vpop.permute.xlu0 %825
        %829 = vset.pattern.permute.xlu0 0
        %830 = vperm.xlu0 %829, %v804
        %v831 = vpop.permute.xlu0 %830
        %834 = vset.pattern.permute.xlu0 0
        %835 = vperm.xlu0 %834, %v805
        %v836 = vpop.permute.xlu0 %835
        %839 = vset.pattern.permute.xlu0 0
        %840 = vperm.xlu0 %839, %v806
        %v841 = vpop.permute.xlu0 %840
        %844 = vset.pattern.permute.xlu0 0
        %845 = vperm.xlu0 %844, %v807
        %v846 = vpop.permute.xlu0 %845
        %v856 = vunpack.c.l.b16 %v792
        %v857 = vunpack.c.l.b16 %v793
        %v858 = vunpack.c.l.b16 %v794
        %v859 = vunpack.c.l.b16 %v795
        %v860 = vunpack.c.l.b16 %v796
        %v861 = vunpack.c.l.b16 %v797
        %v862 = vunpack.c.l.b16 %v798
        %v863 = vunpack.c.l.b16 %v799
        %v864 = vpack.c.b16 %v857, %v856
        %v865 = vpack.c.b16 %v859, %v858
        %v866 = vpack.c.b16 %v861, %v860
        %v867 = vpack.c.b16 %v863, %v862
        %v869 = vsel %vm533, %v864, 0
        %v872 = vsel %vm533, %v865, 0
        %v875 = vsel %vm533, %v866, 0
        %v878 = vsel %vm533, %v867, 0
        %880 = vmatprep.subr.bf16.mxu0 0
        %881 = vmatpush1.bf16.msra.mxu0 %v637
        %882 = vmatprep.subr.bf16.mxu0 0
        %883 = vmatpush1.bf16.msra.mxu0 %v638
        %884 = vmatprep.subr.bf16.mxu0 0
        %885 = vmatpush1.bf16.msra.mxu0 0
        %886 = vmatprep.subr.bf16.mxu0 0
        %887 = vmatpush1.bf16.msra.mxu0 0
        %888 = vmatprep.subr.bf16.mxu0 0
        %889 = vmatpush1.bf16.msra.mxu0 0
        %890 = vmatprep.subr.bf16.mxu0 0
        %891 = vmatpush1.bf16.msra.mxu0 0
        %892 = vmatprep.subr.bf16.mxu0 0
        %893 = vmatpush1.bf16.msra.mxu0 0
        %894 = vmatprep.subr.bf16.mxu0 0
        %895 = vmatpush1.bf16.msra.mxu0 0
        %896 = vmatprep.subr.bf16.mxu0 0
        %897 = vmatpush1.bf16.msra.mxu0 0
        %898 = vmatprep.subr.bf16.mxu0 0
        %899 = vmatpush1.bf16.msra.mxu0 0
        %900 = vmatprep.subr.bf16.mxu0 0
        %901 = vmatpush1.bf16.msra.mxu0 0
        %902 = vmatprep.subr.bf16.mxu0 0
        %903 = vmatpush1.bf16.msra.mxu0 0
        %904 = vmatprep.subr.bf16.mxu0 0
        %905 = vmatpush1.bf16.msra.mxu0 0
        %906 = vmatprep.subr.bf16.mxu0 0
        %907 = vmatpush1.bf16.msra.mxu0 0
        %908 = vmatprep.subr.bf16.mxu0 0
        %909 = vmatpush1.bf16.msra.mxu0 0
        %910 = vmatprep.subr.bf16.mxu0 0
        %911 = vmatpush1.bf16.msra.mxu0 0
        %912 = vmatprep.mubr.bf16.mxu0 0
        %913 = vmatmul.mubr.bf16.gmra.mrb[0].mxu0 %v869
        %v914 = vpop.f32.mrb[0].mxu0
        %v915 = vadd.f32 %v811, %v914
        %v916 = vpop.f32.mrb[0].mxu0
        %v917 = vpop.f32.mrb[0].mxu0
        %v918 = vadd.f32 %v816, %v917
        %v919 = vpop.f32.mrb[0].mxu0
        %920 = vmatprep.mubr.bf16.mxu0 0
        %921 = vmatmul.mubr.bf16.gmra.mrb[0].mxu0 %v872
        %v922 = vpop.f32.mrb[0].mxu0
        %v923 = vadd.f32 %v821, %v922
        %v924 = vpop.f32.mrb[0].mxu0
        %v925 = vpop.f32.mrb[0].mxu0
        %v926 = vadd.f32 %v826, %v925
        %v927 = vpop.f32.mrb[0].mxu0
        %928 = vmatprep.mubr.bf16.mxu0 0
        %929 = vmatmul.mubr.bf16.gmra.mrb[0].mxu0 %v875
        %v930 = vpop.f32.mrb[0].mxu0
        %v931 = vadd.f32 %v831, %v930
        %v932 = vpop.f32.mrb[0].mxu0
        %v933 = vpop.f32.mrb[0].mxu0
        %v934 = vadd.f32 %v836, %v933
        %v935 = vpop.f32.mrb[0].mxu0
        %936 = vmatprep.mubr.bf16.mxu0 0
        %937 = vmatmul.mubr.bf16.gmra.mrb[0].mxu0 %v878
        %v938 = vpop.f32.mrb[0].mxu0
        %v939 = vadd.f32 %v841, %v938
        %v940 = vpop.f32.mrb[0].mxu0
        %v941 = vpop.f32.mrb[0].mxu0
        %v942 = vadd.f32 %v846, %v941
        %v943 = vpop.f32.mrb[0].mxu0
        %944 = vdwg.mxu0
        %v945 = vld [vmem:[%s409] sm:$0xff]
        %v946 = vld [vmem:[%s409 + $0x8] sm:$0xff]
        %v947 = vld [vmem:[%s409 + $0x10] sm:$0xff]
        %v948 = vld [vmem:[%s409 + $0x18] sm:$0xff]
        %v949 = vld [vmem:[%s409 + $0x20] sm:$0xff]
        %v950 = vld [vmem:[%s409 + $0x28] sm:$0xff]
        %v951 = vld [vmem:[%s409 + $0x30] sm:$0xff]
        %v952 = vld [vmem:[%s409 + $0x38] sm:$0xff]
        %v953 = vmul.f32 %v945, %v762
        %v954 = vmul.f32 %v946, %v765
        %v955 = vmul.f32 %v947, %v770
        %v956 = vmul.f32 %v948, %v773
        %v957 = vmul.f32 %v949, %v778
        %v958 = vmul.f32 %v950, %v781
        %v959 = vmul.f32 %v951, %v786
        %v960 = vmul.f32 %v952, %v789
        %v961 = vadd.f32 %v953, %v915
        %v962 = vadd.f32 %v954, %v918
        %v963 = vadd.f32 %v955, %v923
        %v964 = vadd.f32 %v956, %v926
        %v965 = vadd.f32 %v957, %v931
        %v966 = vadd.f32 %v958, %v934
        %v967 = vadd.f32 %v959, %v939
        %v968 = vadd.f32 %v960, %v942
        %969 = vst [vmem:[%s449] sm:$0xff] %v961
        %970 = vst [vmem:[%s449 + $0x8] sm:$0xff] %v962
        %971 = vst [vmem:[%s449 + $0x10] sm:$0xff] %v963
        %972 = vst [vmem:[%s449 + $0x18] sm:$0xff] %v964
        %973 = vst [vmem:[%s449 + $0x20] sm:$0xff] %v965
        %974 = vst [vmem:[%s449 + $0x28] sm:$0xff] %v966
        %975 = vst [vmem:[%s449 + $0x30] sm:$0xff] %v967
        %976 = vst [vmem:[%s449 + $0x38] sm:$0xff] %v968
        %s977 = sand.u32 %s223, 1
        %s978 = sand.u32 %s223, 1
        %s979 = smul.addr %s978, 64
        %s980 = scalar_lea.vmem [#allocation4], %s979
        // Predicated region
        $region129: #{sft_layer.1} parent=119 // pred_check
          %p981 = pneg %p233
        $region130: #{sft_layer.1} parent=119 // pred_check_branch
          %983 = sbr.rel (%p981) target = $region132
        $region131: #{sft_layer.1} parent=119 // pred_region
          %s984 = smul.addr %s23, 16
          %s985 = sadd.s32 %s24, %s984
          %s986 = smul.addr %s985, 8
          %s987 = scalar_lea.vmem %s8, %s986
          // Predicated region
          $region133: #{sft_layer.1} parent=131 // pred_check
            _
          $region134: #{sft_layer.1} parent=131 // pred_check_branch
            %989 = sbr.rel (0) target = $region136
          $region135: #{sft_layer.1} parent=131 // pred_region
            // Predicated region
            $region137: #{sft_layer.1} parent=135 // pred_check
              _
            $region138: #{sft_layer.1} parent=135 // pred_check_branch
              %991 = sbr.rel (0) target = $region140
            $region139: #{sft_layer.1} parent=135 // pred_region
              // Predicated region
              $region152: #{sft_layer.1} parent=139 // pred_check
                _
              $region153: #{sft_layer.1} parent=139 // pred_check_branch
                %1020 = sbr.rel (0) target = $region155
              $region154: #{sft_layer.1} parent=139 // pred_region
                loop: start=0, step=1, limit=1
                $region156: #{sft_layer.1} parent=154 // loop_pre_header
                  _
                $region157: #{sft_layer.1} parent=154 // loop_header
                  %s1022 = sphi 0, %s1026
                  %p1023 = scmp.ge.s32.totalorder %s1022, 1
                  %s1027 = sphi %s980, %s980
                  %s1028 = sphi %s987, %s987
                $region158: #{sft_layer.1} parent=154 // loop_header_branch
                  %1025 = sbr.rel (%p1023) target = $region162
                $region159: #{sft_layer.1} parent=154 // loop_body
                  %v1029 = vld [vmem:[%s1027] sm:$0xff]
                  %1030 = vst [vmem:[%s1028] sm:$0xff] %v1029
                  %v1031 = vld [vmem:[%s1027 + $0x8] sm:$0xff]
                  %1032 = vst [vmem:[%s1028 + $0x10] sm:$0xff] %v1031
                  %v1033 = vld [vmem:[%s1027 + $0x10] sm:$0xff]
                  %1034 = vst [vmem:[%s1028 + $0x20] sm:$0xff] %v1033
                  %v1035 = vld [vmem:[%s1027 + $0x18] sm:$0xff]
                  %1036 = vst [vmem:[%s1028 + $0x30] sm:$0xff] %v1035
                  %v1037 = vld [vmem:[%s1027 + $0x20] sm:$0xff]
                  %1038 = vst [vmem:[%s1028 + $0x40] sm:$0xff] %v1037
                  %v1039 = vld [vmem:[%s1027 + $0x28] sm:$0xff]
                  %1040 = vst [vmem:[%s1028 + $0x50] sm:$0xff] %v1039
                  %v1041 = vld [vmem:[%s1027 + $0x30] sm:$0xff]
                  %1042 = vst [vmem:[%s1028 + $0x60] sm:$0xff] %v1041
                  %v1043 = vld [vmem:[%s1027 + $0x38] sm:$0xff]
                  %1044 = vst [vmem:[%s1028 + $0x70] sm:$0xff] %v1043
                $region160: #{sft_layer.1} parent=154 // loop_footer
                  %s1026 = sadd.s32 1, %s1022
                $region161: #{sft_layer.1} parent=154 // loop_footer_branch
                  %1021 = sbr.rel target = $region157
                $region162: #{sft_layer.1} parent=154 // loop_exit
                  _
              $region155: #{sft_layer.1} parent=139 // pred_fallthru
                _
              // Predicated region
              $region163: #{sft_layer.1} parent=139 // pred_check
                _
              $region164: #{sft_layer.1} parent=139 // pred_check_branch
                %1046 = sbr.rel target = $region166
              $region165: #{sft_layer.1} parent=139 // pred_region
                _
              $region166: #{sft_layer.1} parent=139 // pred_fallthru
                _
            $region140: #{sft_layer.1} parent=135 // pred_fallthru
              _
            // Predicated region
            $region141: #{sft_layer.1} parent=135 // pred_check
              _
            $region142: #{sft_layer.1} parent=135 // pred_check_branch
              %993 = sbr.rel target = $region144
            $region143: #{sft_layer.1} parent=135 // pred_region
              loop: start=0, step=1, limit=1
              $region145: #{sft_layer.1} parent=143 // loop_pre_header
                _
              $region146: #{sft_layer.1} parent=143 // loop_header
                %s996 = sphi 0, %s1000
                %p997 = scmp.ge.s32.totalorder %s996, 1
                %s1001 = sphi %s980, %s980
                %s1002 = sphi %s987, %s987
              $region147: #{sft_layer.1} parent=143 // loop_header_branch
                %999 = sbr.rel (%p997) target = $region151
              $region148: #{sft_layer.1} parent=143 // loop_body
                %v1003 = vld [vmem:[%s1001] sm:$0xff]
                %1004 = vst [vmem:[%s1002] sm:$0xff] %v1003
                %v1005 = vld [vmem:[%s1001 + $0x8] sm:$0xff]
                %1006 = vst [vmem:[%s1002 + $0x10] sm:$0xff] %v1005
                %v1007 = vld [vmem:[%s1001 + $0x10] sm:$0xff]
                %1008 = vst [vmem:[%s1002 + $0x20] sm:$0xff] %v1007
                %v1009 = vld [vmem:[%s1001 + $0x18] sm:$0xff]
                %1010 = vst [vmem:[%s1002 + $0x30] sm:$0xff] %v1009
                %v1011 = vld [vmem:[%s1001 + $0x20] sm:$0xff]
                %1012 = vst [vmem:[%s1002 + $0x40] sm:$0xff] %v1011
                %v1013 = vld [vmem:[%s1001 + $0x28] sm:$0xff]
                %1014 = vst [vmem:[%s1002 + $0x50] sm:$0xff] %v1013
                %v1015 = vld [vmem:[%s1001 + $0x30] sm:$0xff]
                %1016 = vst [vmem:[%s1002 + $0x60] sm:$0xff] %v1015
                %v1017 = vld [vmem:[%s1001 + $0x38] sm:$0xff]
                %1018 = vst [vmem:[%s1002 + $0x70] sm:$0xff] %v1017
              $region149: #{sft_layer.1} parent=143 // loop_footer
                %s1000 = sadd.s32 1, %s996
              $region150: #{sft_layer.1} parent=143 // loop_footer_branch
                %995 = sbr.rel target = $region146
              $region151: #{sft_layer.1} parent=143 // loop_exit
                _
            $region144: #{sft_layer.1} parent=135 // pred_fallthru
              _
          $region136: #{sft_layer.1} parent=131 // pred_fallthru
            _
          %1047 = vnop
        $region132: #{sft_layer.1} parent=119 // pred_fallthru
          _
      $region120: #{sft_layer.1} parent=5 // pred_fallthru
        _
      %p1048 = scmp.le.s32.totalorder 2, %s14
      // Predicated region
      $region167: #{sft_layer.1} parent=5 // pred_check
        %p1049 = pneg %p1048
      $region168: #{sft_layer.1} parent=5 // pred_check_branch
        %1051 = sbr.rel (%p1049) target = $region170
      $region169: #{sft_layer.1} parent=5 // pred_region
        %s1052 = ssub.s32 %s14, 2
        // Predicated region
        $region171: #{sft_layer.1} parent=169 // pred_check
          %p1053 = pneg %p239
        $region172: #{sft_layer.1} parent=169 // pred_check_branch
          %1055 = sbr.rel (%p1053) target = $region174
        $region173: #{sft_layer.1} parent=169 // pred_region
          %s1056 = sand.u32 %s224, 1
          %s1057 = sand.u32 %s224, 1
          %s1058 = smul.addr %s1057, 64
          %s1059 = scalar_lea.vmem [#allocation4], %s1058
        $region174: #{sft_layer.1} parent=169 // pred_fallthru
          _
      $region170: #{sft_layer.1} parent=5 // pred_fallthru
        _
    $region6: #{sft_layer.1} parent=1 // loop_footer
      %s18 = sadd.s32 1, %s14
    $region7: #{sft_layer.1} parent=1 // loop_footer_branch
      %13 = sbr.rel target = $region3
    $region8: #{sft_layer.1} parent=1 // loop_exit
      _

</llo_original>
